<compile_context>
chip_gen: v7x
topology: tpu7x:2x2x1
jax: 0.10.0
libtpu: 0.0.40
codegen_flags: <defaults>
</compile_context>

<pallas_src>
import jax
import jax.numpy as jnp
from jax.experimental import pallas as pl
from jax.experimental.pallas import tpu as pltpu  # noqa: F401  (kept for TPU backend)

_LANES = 128
_SUBLANES = 8


def add_relu_kernel(a_ref, b_ref, o_ref):
    # Fused elementwise add + ReLU on the whole lane-dense VMEM tile.
    o_ref[...] = jnp.maximum(a_ref[...] + b_ref[...], 0.0)


def _add_relu_impl(x201, x209):
    assert x201.shape == x209.shape and x201.dtype == x209.dtype
    orig_shape = x201.shape
    n_elems = x201.size

    # Pad the flattened data to a lane-dense (rows, 128) slab, rows % 8 == 0.
    rows = pl.cdiv(pl.cdiv(n_elems, _LANES), _SUBLANES) * _SUBLANES
    padded = rows * _LANES
    pad = padded - n_elems

    a2d = jnp.pad(x201.reshape(-1), (0, pad)).reshape(rows, _LANES)
    b2d = jnp.pad(x209.reshape(-1), (0, pad)).reshape(rows, _LANES)

    out2d = pl.pallas_call(
        add_relu_kernel,
        out_shape=jax.ShapeDtypeStruct((rows, _LANES), a2d.dtype),
        grid=(),
        in_specs=[
            pl.BlockSpec((rows, _LANES), lambda: (0, 0)),
            pl.BlockSpec((rows, _LANES), lambda: (0, 0)),
        ],
        out_specs=pl.BlockSpec((rows, _LANES), lambda: (0, 0)),
        input_output_aliases={0: 0},  # reuse a2d's buffer for the output
    )(a2d, b2d)

    return out2d.reshape(-1)[:n_elems].reshape(orig_shape)


add_relu = jax.jit(_add_relu_impl)


if __name__ == "__main__":
    key = jax.random.PRNGKey(0)
    k1, k2 = jax.random.split(key)
    # Same shape convention as the PyTorch module: [1, 400, 7, 7]
    x201 = jax.random.normal(k1, (1, 400, 7, 7), dtype=jnp.float32)
    x209 = jax.random.normal(k2, (1, 400, 7, 7), dtype=jnp.float32)

    out = add_relu(x201, x209)
    jax.block_until_ready(out)

    # Correctness check against plain-JAX reference.
    ref = jnp.maximum(x201 + x209, 0.0)
    assert out.shape == (1, 400, 7, 7)
    assert jnp.allclose(out, ref, atol=1e-6), "mismatch vs reference"

    print("KERNEL_OK")
</pallas_src>

<mosaic_0001>
module attributes {stable_mosaic.version = 11 : i64} {
  func.func @add_relu_kernel(%arg0: memref<160x128xf32, #tpu.memory_space<vmem>>, %arg1: memref<160x128xf32, #tpu.memory_space<vmem>>, %arg2: memref<160x128xf32, #tpu.memory_space<vmem>>) attributes {dimension_semantics = [], scalar_prefetch = 0 : i64, scratch_operands = 0 : i64, tpu.core_type = #tpu.core_type<tc>} {
    %c0 = arith.constant 0 : index
    %c0_0 = arith.constant 0 : index
    %0 = vector.load %arg0[%c0, %c0_0] : memref<160x128xf32, #tpu.memory_space<vmem>>, vector<160x128xf32>
    %c0_1 = arith.constant 0 : index
    %c0_2 = arith.constant 0 : index
    %1 = vector.load %arg1[%c0_1, %c0_2] : memref<160x128xf32, #tpu.memory_space<vmem>>, vector<160x128xf32>
    %2 = arith.addf %0, %1 : vector<160x128xf32>
    %cst = arith.constant 0.000000e+00 : f32
    %3 = vector.broadcast %cst : f32 to vector<160x128xf32>
    %4 = arith.maximumf %2, %3 : vector<160x128xf32>
    %c0_3 = arith.constant 0 : index
    %c0_4 = arith.constant 0 : index
    %5 = vector.load %arg2[%c0_3, %c0_4] : memref<160x128xf32, #tpu.memory_space<vmem>>, vector<160x128xf32>
    tpu.vector_store %arg2[%c0_3, %c0_4], %4 {strides = array<i32>} : memref<160x128xf32, #tpu.memory_space<vmem>>, vector<160x128xf32>,
    return
  }
}

</mosaic_0001>

<llo_original>
// kernel: _add_relu_impl.1
$region0: #{_add_relu_impl.1}
  #allocation0 [shape = 'u32[]', space=smem, size = 0x4, offset = 0x4, fixed_abs, tag = 'smem constant byte address 0x4 - core index']
  #allocation1 [shape = 'u32[144,128]{1,0:T(1,128)}', space=vmem, size = 0x12000, scoped, tag = 'internal scratch']
  %s0 = inlined_call_operand.vmem [shape: f32[160,128], index: 0, kind: input, shape index: {}, may-alias: {0,2}]
  %s1 = inlined_call_operand.vmem [shape: f32[160,128], index: 1, kind: input, shape index: {}]
  %s2 = inlined_call_operand.vmem [shape: f32[160,128], index: 2, kind: output, shape index: {}, may-alias: {0,2}]
  %s3 = sld [smem:[#allocation0]]
  $region18: #{_add_relu_impl.1} parent=0
    _
  %s5 = ssub.s32 1, %s3
  %s6 = scalar_select 0, %s5, %s3
  // Predicated region
  $region2: #{_add_relu_impl.1} parent=0 // pred_check
    _
  $region3: #{_add_relu_impl.1} parent=0 // pred_check_branch
    %8 = sbr.rel (0) target = $region5
  $region4: #{_add_relu_impl.1} parent=0 // pred_region
    _
  $region5: #{_add_relu_impl.1} parent=0 // pred_fallthru
    _
  // Predicated region
  $region6: #{_add_relu_impl.1} parent=0 // pred_check
    _
  $region7: #{_add_relu_impl.1} parent=0 // pred_check_branch
    %10 = sbr.rel (0) target = $region9
  $region8: #{_add_relu_impl.1} parent=0 // pred_region
    _
  $region9: #{_add_relu_impl.1} parent=0 // pred_fallthru
    _
  %v11 = vld [vmem:[%s0] sm:$0xff]
  %v12 = vld [vmem:[%s0 + $0x8] sm:$0xff]
  %v13 = vld [vmem:[%s0 + $0x10] sm:$0xff]
  %v14 = vld [vmem:[%s0 + $0x18] sm:$0xff]
  %v15 = vld [vmem:[%s0 + $0x20] sm:$0xff]
  %v16 = vld [vmem:[%s0 + $0x28] sm:$0xff]
  %v17 = vld [vmem:[%s0 + $0x30] sm:$0xff]
  %v18 = vld [vmem:[%s0 + $0x38] sm:$0xff]
  %v19 = vld [vmem:[%s0 + $0x40] sm:$0xff]
  %v20 = vld [vmem:[%s0 + $0x48] sm:$0xff]
  %v21 = vld [vmem:[%s0 + $0x50] sm:$0xff]
  %v22 = vld [vmem:[%s0 + $0x58] sm:$0xff]
  %v23 = vld [vmem:[%s0 + $0x60] sm:$0xff]
  %v24 = vld [vmem:[%s0 + $0x68] sm:$0xff]
  %v25 = vld [vmem:[%s0 + $0x70] sm:$0xff]
  %v26 = vld [vmem:[%s0 + $0x78] sm:$0xff]
  %v27 = vld [vmem:[%s0 + $0x80] sm:$0xff]
  %v28 = vld [vmem:[%s0 + $0x88] sm:$0xff]
  %v29 = vld [vmem:[%s0 + $0x90] sm:$0xff]
  %v30 = vld [vmem:[%s0 + $0x98] sm:$0xff]
  %v31 = vld [vmem:[%s1] sm:$0xff]
  %v32 = vld [vmem:[%s1 + $0x8] sm:$0xff]
  %v33 = vld [vmem:[%s1 + $0x10] sm:$0xff]
  %v34 = vld [vmem:[%s1 + $0x18] sm:$0xff]
  %v35 = vld [vmem:[%s1 + $0x20] sm:$0xff]
  %v36 = vld [vmem:[%s1 + $0x28] sm:$0xff]
  %v37 = vld [vmem:[%s1 + $0x30] sm:$0xff]
  %v38 = vld [vmem:[%s1 + $0x38] sm:$0xff]
  %v39 = vld [vmem:[%s1 + $0x40] sm:$0xff]
  %v40 = vld [vmem:[%s1 + $0x48] sm:$0xff]
  %v41 = vld [vmem:[%s1 + $0x50] sm:$0xff]
  %v42 = vld [vmem:[%s1 + $0x58] sm:$0xff]
  %v43 = vld [vmem:[%s1 + $0x60] sm:$0xff]
  %v44 = vld [vmem:[%s1 + $0x68] sm:$0xff]
  %v45 = vld [vmem:[%s1 + $0x70] sm:$0xff]
  %v46 = vld [vmem:[%s1 + $0x78] sm:$0xff]
  %v47 = vld [vmem:[%s1 + $0x80] sm:$0xff]
  %v48 = vld [vmem:[%s1 + $0x88] sm:$0xff]
  %v49 = vld [vmem:[%s1 + $0x90] sm:$0xff]
  %v50 = vld [vmem:[%s1 + $0x98] sm:$0xff]
  %v51 = vadd.f32 %v11, %v31
  %v52 = vadd.f32 %v12, %v32
  %v53 = vadd.f32 %v13, %v33
  %v54 = vadd.f32 %v14, %v34
  %v55 = vadd.f32 %v15, %v35
  %v56 = vadd.f32 %v16, %v36
  %v57 = vadd.f32 %v17, %v37
  %v58 = vadd.f32 %v18, %v38
  %v59 = vadd.f32 %v19, %v39
  %v60 = vadd.f32 %v20, %v40
  %v61 = vadd.f32 %v21, %v41
  %v62 = vadd.f32 %v22, %v42
  %v63 = vadd.f32 %v23, %v43
  %v64 = vadd.f32 %v24, %v44
  %v65 = vadd.f32 %v25, %v45
  %v66 = vadd.f32 %v26, %v46
  %v67 = vadd.f32 %v27, %v47
  %v68 = vadd.f32 %v28, %v48
  %v69 = vadd.f32 %v29, %v49
  %v70 = vadd.f32 %v30, %v50
  %v71 = vmax.f32 %v51, 0.0
  %v72 = vmax.f32 %v52, 0.0
  %v73 = vmax.f32 %v53, 0.0
  %v74 = vmax.f32 %v54, 0.0
  %v75 = vmax.f32 %v55, 0.0
  %v76 = vmax.f32 %v56, 0.0
  %v77 = vmax.f32 %v57, 0.0
  %v78 = vmax.f32 %v58, 0.0
  %v79 = vmax.f32 %v59, 0.0
  %v80 = vmax.f32 %v60, 0.0
  %v81 = vmax.f32 %v61, 0.0
  %v82 = vmax.f32 %v62, 0.0
  %v83 = vmax.f32 %v63, 0.0
  %v84 = vmax.f32 %v64, 0.0
  %v85 = vmax.f32 %v65, 0.0
  %v86 = vmax.f32 %v66, 0.0
  %v87 = vmax.f32 %v67, 0.0
  %v88 = vmax.f32 %v68, 0.0
  %v89 = vmax.f32 %v69, 0.0
  %v90 = vmax.f32 %v70, 0.0
  %91 = vst [vmem:[%s2] sm:$0xff] %v71
  %92 = vst [vmem:[%s2 + $0x8] sm:$0xff] %v72
  %93 = vst [vmem:[%s2 + $0x10] sm:$0xff] %v73
  %94 = vst [vmem:[%s2 + $0x18] sm:$0xff] %v74
  %95 = vst [vmem:[%s2 + $0x20] sm:$0xff] %v75
  %96 = vst [vmem:[%s2 + $0x28] sm:$0xff] %v76
  %97 = vst [vmem:[%s2 + $0x30] sm:$0xff] %v77
  %98 = vst [vmem:[%s2 + $0x38] sm:$0xff] %v78
  %99 = vst [vmem:[%s2 + $0x40] sm:$0xff] %v79
  %100 = vst [vmem:[%s2 + $0x48] sm:$0xff] %v80
  %101 = vst [vmem:[%s2 + $0x50] sm:$0xff] %v81
  %102 = vst [vmem:[%s2 + $0x58] sm:$0xff] %v82
  %103 = vst [vmem:[%s2 + $0x60] sm:$0xff] %v83
  %104 = vst [vmem:[%s2 + $0x68] sm:$0xff] %v84
  %105 = vst [vmem:[%s2 + $0x70] sm:$0xff] %v85
  %106 = vst [vmem:[%s2 + $0x78] sm:$0xff] %v86
  %107 = vst [vmem:[%s2 + $0x80] sm:$0xff] %v87
  %108 = vst [vmem:[%s2 + $0x88] sm:$0xff] %v88
  %109 = vst [vmem:[%s2 + $0x90] sm:$0xff] %v89
  %110 = vst [vmem:[%s2 + $0x98] sm:$0xff] %v90
  // Predicated region
  $region10: #{_add_relu_impl.1} parent=0 // pred_check
    _
  $region11: #{_add_relu_impl.1} parent=0 // pred_check_branch
    %112 = sbr.rel (0) target = $region13
  $region12: #{_add_relu_impl.1} parent=0 // pred_region
    _
  $region13: #{_add_relu_impl.1} parent=0 // pred_fallthru
    _
  // Predicated region
  $region14: #{_add_relu_impl.1} parent=0 // pred_check
    _
  $region15: #{_add_relu_impl.1} parent=0 // pred_check_branch
    %114 = sbr.rel (0) target = $region17
  $region16: #{_add_relu_impl.1} parent=0 // pred_region
    _
  $region17: #{_add_relu_impl.1} parent=0 // pred_fallthru
    _

</llo_original>
